<compile_context>
chip_gen: v7x
topology: tpu7x:2x2x1
jax: 0.10.0
libtpu: 0.0.40
codegen_flags: <defaults>
</compile_context>

<pallas_src>
import functools

import jax
import jax.numpy as jnp
from jax.experimental import pallas as pl
from jax.experimental.pallas import tpu as pltpu


def _round_up(x, m):
    return ((x + m - 1) // m) * m


def _ce_label_smooth_kernel(
    logits_ref,   # (TILE_N, C)  input dtype (f32 / bf16)
    targets_ref,  # (TILE_N, 1)  int32
    out_ref,      # (TILE_N, 1)  float32 per-row loss
    *,
    epsilon,
    num_classes,
    n_valid,
    tile_n,
):
    x_in = logits_ref[...]                                 # native dtype
    tgt = targets_ref[...]                                 # (TILE_N, 1) int32

    # Row max in the input dtype (max is exact); shift / exp / log in f32.
    m = jnp.max(x_in, axis=1, keepdims=True).astype(jnp.float32)
    shifted = x_in.astype(jnp.float32) - m                 # (TILE_N, C), <= 0
    lse = jnp.log(jnp.sum(jnp.exp(shifted), axis=1, keepdims=True))

    # Smoothed target weights t_c = (1-eps)*onehot + eps/C via a single select
    # (no one-hot tensor, no separate target-gather reduction).
    cls_idx = jax.lax.broadcasted_iota(jnp.int32, shifted.shape, 1)
    w = jnp.where(
        cls_idx == tgt,
        1.0 - epsilon + epsilon / num_classes,
        epsilon / num_classes,
    )

    # loss_row = sum_c t_c * (lse - shifted_c) = lse - sum_c t_c * shifted_c
    per_row = lse - jnp.sum(w * shifted, axis=1, keepdims=True)

    # Zero rows beyond the true batch (ragged last tile reads garbage rows;
    # jnp.where does not propagate NaN/Inf from the unselected branch).
    if n_valid % tile_n != 0:
        row_idx = pl.program_id(0) * tile_n + jax.lax.broadcasted_iota(
            jnp.int32, per_row.shape, 0
        )
        per_row = jnp.where(row_idx < n_valid, per_row, 0.0)

    out_ref[...] = per_row


def cross_entropy_label_smooth(
    logits, targets, *, num_classes, epsilon, tile_rows=None
):
    """logits: (N, C) float (f32/bf16); targets: (N,) int -> scalar f32 loss."""
    n, c = logits.shape
    assert c == num_classes

    itemsize = jnp.dtype(logits.dtype).itemsize
    # Native sublane packing: 8 rows for f32, 16 for bf16, 32 for 8-bit.
    sublane = max(8, 32 // itemsize)

    if tile_rows is None:
        # Real VMEM footprint per batch row: double-buffered input tile plus
        # roughly three full-tile f32 intermediates around the row reductions.
        bytes_per_row = c * (2 * itemsize + 3 * 4) + 16
        budget = 12 * 1024 * 1024  # fits v5e's 16 MiB scoped default / v7x VMEM
        tile_n = budget // bytes_per_row
        tile_n = max(sublane, min(4096, (tile_n // sublane) * sublane))
    else:
        tile_n = max(sublane, (int(tile_rows) // sublane) * sublane)
    tile_n = min(tile_n, _round_up(n, sublane))

    num_tiles = pl.cdiv(n, tile_n)
    n_out = num_tiles * tile_n  # padded rows are written as exact zeros

    targets_2d = targets.astype(jnp.int32).reshape(n, 1)

    kernel = functools.partial(
        _ce_label_smooth_kernel,
        epsilon=float(epsilon),
        num_classes=num_classes,
        n_valid=n,
        tile_n=tile_n,
    )

    per_row = pl.pallas_call(
        kernel,
        out_shape=jax.ShapeDtypeStruct((n_out, 1), jnp.float32),
        grid=(num_tiles,),
        in_specs=[
            # Full class dim in one block (no class padding, no extra HBM pass).
            pl.BlockSpec((tile_n, c), lambda i: (i, 0)),
            pl.BlockSpec((tile_n, 1), lambda i: (i, 0)),
        ],
        out_specs=pl.BlockSpec((tile_n, 1), lambda i: (i, 0)),
        compiler_params=pltpu.CompilerParams(
            dimension_semantics=("parallel",),  # independent tiles -> both TCs
        ),
    )(logits, targets_2d)

    return jnp.sum(per_row) / n


def _reference(logits, targets, *, num_classes, epsilon):
    # Pure-JAX reference mirroring the PyTorch module exactly.
    log_probs = jax.nn.log_softmax(logits.astype(jnp.float32), axis=1)
    onehot = jax.nn.one_hot(targets, num_classes, dtype=jnp.float32)
    t = (1.0 - epsilon) * onehot + epsilon / num_classes
    return jnp.mean(jnp.sum(-t * log_probs, axis=1))


if __name__ == "__main__":
    key = jax.random.PRNGKey(0)
    k1, k2, k3, k4, k5, k6 = jax.random.split(key, 6)

    # Case 1: small f32 problem, batch divides the tile exactly.
    batch, num_classes, epsilon = 8, 16, 0.1
    logits = jax.random.normal(k1, (batch, num_classes), dtype=jnp.float32)
    targets = jax.random.randint(k2, (batch,), 0, num_classes, dtype=jnp.int32)
    loss = jax.block_until_ready(
        cross_entropy_label_smooth(
            logits, targets, num_classes=num_classes, epsilon=epsilon
        )
    )
    ref = _reference(logits, targets, num_classes=num_classes, epsilon=epsilon)
    assert jnp.allclose(loss, ref, atol=1e-5, rtol=1e-5), (loss, ref)

    # Case 2: bf16 logits, ragged batch, class count not a multiple of 128.
    batch2, num_classes2, epsilon2 = 10, 200, 0.1
    logits2 = jax.random.normal(k3, (batch2, num_classes2), dtype=jnp.bfloat16)
    targets2 = jax.random.randint(
        k4, (batch2,), 0, num_classes2, dtype=jnp.int32
    )
    loss2 = jax.block_until_ready(
        cross_entropy_label_smooth(
            logits2, targets2, num_classes=num_classes2, epsilon=epsilon2
        )
    )
    ref2 = _reference(
        logits2, targets2, num_classes=num_classes2, epsilon=epsilon2
    )
    assert jnp.allclose(loss2, ref2, atol=1e-4, rtol=1e-4), (loss2, ref2)

    # Case 3: multi-tile grid with a ragged last tile (forced small tile).
    batch3, num_classes3, epsilon3 = 20, 16, 0.2
    logits3 = jax.random.normal(k5, (batch3, num_classes3), dtype=jnp.float32)
    targets3 = jax.random.randint(
        k6, (batch3,), 0, num_classes3, dtype=jnp.int32
    )
    loss3 = jax.block_until_ready(
        cross_entropy_label_smooth(
            logits3,
            targets3,
            num_classes=num_classes3,
            epsilon=epsilon3,
            tile_rows=8,
        )
    )
    ref3 = _reference(
        logits3, targets3, num_classes=num_classes3, epsilon=epsilon3
    )
    assert jnp.allclose(loss3, ref3, atol=1e-5, rtol=1e-5), (loss3, ref3)

    print("KERNEL_OK")
</pallas_src>

<mosaic_0001>
module attributes {stable_mosaic.version = 11 : i64} {
  func.func @_ce_label_smooth_kernel(%arg0: i32, %arg1: memref<8x16xf32, #tpu.memory_space<vmem>>, %arg2: memref<8x1xi32, #tpu.memory_space<vmem>>, %arg3: memref<8x1xf32, #tpu.memory_space<vmem>>) attributes {dimension_semantics = [#tpu.dimension_semantics<parallel>], iteration_bounds = array<i64: 1>, scalar_prefetch = 0 : i64, scratch_operands = 0 : i64, tpu.core_type = #tpu.core_type<tc>, window_params = [{transform_indices = @transform_0, window_bounds = array<i64: 8, 16>}, {transform_indices = @transform_1, window_bounds = array<i64: 8, 1>}, {transform_indices = @transform_2, window_bounds = array<i64: 8, 1>}]} {
    %c0 = arith.constant 0 : index
    %c0_0 = arith.constant 0 : index
    %0 = vector.load %arg1[%c0, %c0_0] : memref<8x16xf32, #tpu.memory_space<vmem>>, vector<8x16xf32>
    %c0_1 = arith.constant 0 : index
    %c0_2 = arith.constant 0 : index
    %1 = vector.load %arg2[%c0_1, %c0_2] : memref<8x1xi32, #tpu.memory_space<vmem>>, vector<8x1xi32>
    %cst = arith.constant dense<0xFF800000> : vector<8xf32>
    %2 = vector.multi_reduction <maximumf>, %0, %cst [1] : vector<8x16xf32> to vector<8xf32>
    %3 = vector.shape_cast %2 : vector<8xf32> to vector<8x1xf32>
    %4 = vector.broadcast %3 : vector<8x1xf32> to vector<8x16xf32>
    %5 = arith.subf %0, %4 : vector<8x16xf32>
    %6 = math.exp %5 : vector<8x16xf32>
    %cst_3 = arith.constant dense<0.000000e+00> : vector<8xf32>
    %7 = vector.multi_reduction <add>, %6, %cst_3 [1] : vector<8x16xf32> to vector<8xf32>
    %8 = vector.shape_cast %7 : vector<8xf32> to vector<8x1xf32>
    %9 = math.log %8 : vector<8x1xf32>
    %10 = tpu.iota {dimensions = array<i32: 1>} : vector<8x16xi32>
    %11 = vector.broadcast %1 : vector<8x1xi32> to vector<8x16xi32>
    %12 = arith.cmpi eq, %10, %11 : vector<8x16xi32>
    %cst_4 = arith.constant 9.062500e-01 : f32
    %cst_5 = arith.constant 6.250000e-03 : f32
    %13 = vector.broadcast %cst_4 : f32 to vector<8x16xf32>
    %14 = vector.broadcast %cst_5 : f32 to vector<8x16xf32>
    %15 = arith.select %12, %13, %14 : vector<8x16xi1>, vector<8x16xf32>
    %16 = arith.mulf %15, %5 : vector<8x16xf32>
    %cst_6 = arith.constant dense<0.000000e+00> : vector<8xf32>
    %17 = vector.multi_reduction <add>, %16, %cst_6 [1] : vector<8x16xf32> to vector<8xf32>
    %18 = vector.shape_cast %17 : vector<8xf32> to vector<8x1xf32>
    %19 = arith.subf %9, %18 : vector<8x1xf32>
    %c0_7 = arith.constant 0 : index
    %c0_8 = arith.constant 0 : index
    %20 = vector.load %arg3[%c0_7, %c0_8] : memref<8x1xf32, #tpu.memory_space<vmem>>, vector<8x1xf32>
    tpu.vector_store %arg3[%c0_7, %c0_8], %19 {strides = array<i32>} : memref<8x1xf32, #tpu.memory_space<vmem>>, vector<8x1xf32>,
    return
  }
  func.func @transform_0(%arg0: i32) -> (i32, i32) {
    %c0_i32 = arith.constant 0 : i32
    %c0_i32_0 = arith.constant 0 : i32
    return %arg0, %c0_i32 : i32, i32
  }
  func.func @transform_1(%arg0: i32) -> (i32, i32) {
    %c0_i32 = arith.constant 0 : i32
    %c0_i32_0 = arith.constant 0 : i32
    return %arg0, %c0_i32 : i32, i32
  }
  func.func @transform_2(%arg0: i32) -> (i32, i32) {
    %c0_i32 = arith.constant 0 : i32
    %c0_i32_0 = arith.constant 0 : i32
    return %arg0, %c0_i32 : i32, i32
  }
}

</mosaic_0001>

<llo_original>
// kernel: tpu_custom_call.1
$region0: #{tpu_custom_call.1}
  #allocation0 [shape = 'u32[]', space=smem, size = 0x4, offset = 0x4, fixed_abs, tag = 'smem constant byte address 0x4 - core index']
  #allocation1 [shape = 'u32[144,128]{1,0:T(1,128)}', space=vmem, size = 0x12000, scoped, tag = 'internal scratch']
  %s0 = inlined_call_operand.vmem [shape: f32[8,16], index: 0, kind: input, shape index: {}]
  %s1 = inlined_call_operand.vmem [shape: s32[8,1], index: 1, kind: input, shape index: {}]
  %s2 = inlined_call_operand.vmem [shape: f32[8,1], index: 2, kind: output, shape index: {}]
  %s3 = sld [smem:[#allocation0]]
  $region18: #{tpu_custom_call.1} parent=0
    _
  %s5 = ssub.s32 1, %s3
  %s6 = scalar_select 0, %s5, %s3
  // Predicated region
  $region2: #{tpu_custom_call.1} parent=0 // pred_check
    _
  $region3: #{tpu_custom_call.1} parent=0 // pred_check_branch
    %8 = sbr.rel (0) target = $region5
  $region4: #{tpu_custom_call.1} parent=0 // pred_region
    _
  $region5: #{tpu_custom_call.1} parent=0 // pred_fallthru
    _
  // Predicated region
  $region6: #{tpu_custom_call.1} parent=0 // pred_check
    _
  $region7: #{tpu_custom_call.1} parent=0 // pred_check_branch
    %10 = sbr.rel (0) target = $region9
  $region8: #{tpu_custom_call.1} parent=0 // pred_region
    _
  $region9: #{tpu_custom_call.1} parent=0 // pred_fallthru
    _
  %v11 = vld [vmem:[%s0] sm:$0xff]
  %v12 = vld [vmem:[%s1] sm:$0xff]
  %vm13 = vcmask 130048
  %v14 = vsel %vm13, %v11, -inf
  %15 = vmax.xlane.f32.xlu0 %v14
  %v16 = vpop.xlane.xlu0 %15
  %v17 = vsub.f32 %v11, %v16
  %v18 = vmul.f32 %v17, 1.442695
  %v19 = vpow.pop %v18
  %v20 = vsel %vm13, %v19, 0.0
  %21 = vadd.xlane.f32.xlu0 %v20
  %v22 = vpop.xlane.xlu0 %21
  %v23 = vlog2.pop %v22
  %v24 = vmul.f32 %v23, 0.6931472
  %v25 = vlaneseq
  %v26 = vand.u32 %v25, 127
  %27 = vset.pattern.permute.xlu0 0
  %28 = vperm.xlu0 %27, %v12
  %v29 = vpop.permute.xlu0 %28
  %vm30 = vcmp.eq.s32.totalorder %v26, %v29
  %v31 = vsel %vm30, 0.90625, 0.00625
  %v32 = vmul.f32 %v31, %v17
  %v33 = vsel %vm13, %v32, 0.0
  %34 = vadd.xlane.f32.xlu0 %v33
  %v35 = vpop.xlane.xlu0 %34
  %v36 = vsub.f32 %v24, %v35
  %vm37 = vcmask 7168
  %38 = vst.msk [vmem:[%s2] sm:$0xff] %vm37, %v36
  // Predicated region
  $region10: #{tpu_custom_call.1} parent=0 // pred_check
    _
  $region11: #{tpu_custom_call.1} parent=0 // pred_check_branch
    %40 = sbr.rel (0) target = $region13
  $region12: #{tpu_custom_call.1} parent=0 // pred_region
    _
  $region13: #{tpu_custom_call.1} parent=0 // pred_fallthru
    _
  // Predicated region
  $region14: #{tpu_custom_call.1} parent=0 // pred_check
    _
  $region15: #{tpu_custom_call.1} parent=0 // pred_check_branch
    %42 = sbr.rel (0) target = $region17
  $region16: #{tpu_custom_call.1} parent=0 // pred_region
    _
  $region17: #{tpu_custom_call.1} parent=0 // pred_fallthru
    _

</llo_original>
